<compile_context>
chip_gen: v7x
topology: tpu7x:2x2x1
jax: 0.10.0
libtpu: 0.0.40
codegen_flags: <defaults>
</compile_context>

<pallas_src>
import functools

import jax
import jax.numpy as jnp
from jax.experimental import pallas as pl
from jax.experimental.pallas import tpu as pltpu

SUBLANE = 16    # bf16 intermediates pack 16 rows per vreg sublane group
MAX_TB = 2048   # max rows per batch tile (VMEM << default scoped limit)


def _round_up(x, m):
    return (x + m - 1) // m * m


def qnetwork_kernel(x_ref,
                    w1_ref, b1_ref,
                    w2_ref, b2_ref,
                    w3_ref, b3_ref,
                    w4_ref, b4_ref,
                    o_ref):
    """Fused 4-layer MLP forward for one (TB, state_size) batch tile.

    Weights are bf16 (f32 accumulation on the MXU via preferred_element_type);
    bias-add + ReLU run in f32 on the VPU.  Weights/biases keep their natural
    (un-padded) shapes; full-dim blocks are legal.
    """
    h = x_ref[...].astype(jnp.bfloat16)

    h = jnp.dot(h, w1_ref[...], preferred_element_type=jnp.float32) + b1_ref[...]
    h = jnp.maximum(h, 0.0).astype(jnp.bfloat16)

    h = jnp.dot(h, w2_ref[...], preferred_element_type=jnp.float32) + b2_ref[...]
    h = jnp.maximum(h, 0.0).astype(jnp.bfloat16)

    h = jnp.dot(h, w3_ref[...], preferred_element_type=jnp.float32) + b3_ref[...]
    h = jnp.maximum(h, 0.0).astype(jnp.bfloat16)

    h = jnp.dot(h, w4_ref[...], preferred_element_type=jnp.float32) + b4_ref[...]

    o_ref[...] = h.astype(o_ref.dtype)


def prepare_params(params):
    """One-time (init-time) prep: cast weights to bf16, biases to f32.

    No padding: all weight/bias shapes are used as full-dim blocks.
    Call this ONCE and reuse the result across forward calls.
    """
    pp = {}
    for i in range(1, 5):
        pp[f"w{i}"] = params[f"w{i}"].astype(jnp.bfloat16)
        pp[f"b{i}"] = params[f"b{i}"].astype(jnp.float32)
    return pp


@functools.partial(jax.jit, static_argnames=("max_tb",))
def qnetwork_forward(state, pp, *, max_tb=MAX_TB):
    """Fused QNetwork forward.

    state: [B, state_size] float32
    pp:    prepared params (bf16 weights [in, out], f32 biases [1, out]),
           equivalent to PyTorch's x @ W.T + b.
    returns [B, action_size] float32
    """
    B, state_size = state.shape
    h1 = pp["w1"].shape[1]
    h2 = pp["w2"].shape[1]
    h3 = pp["w3"].shape[1]
    action_size = pp["w4"].shape[1]

    # Batch tile: 16-row aligned, ~ceil(B/2) so large batches give >= 2 grid
    # tiles (keeps both v7x TensorCores busy), capped at max_tb.
    half = -(-B // 2)
    tb = min(max_tb, max(SUBLANE, _round_up(half, SUBLANE)))
    b_pad = _round_up(B, tb)
    x = state if b_pad == B else jnp.pad(state, ((0, b_pad - B), (0, 0)))
    grid = (b_pad // tb,)

    flops = 2 * b_pad * (state_size * h1 + h1 * h2 + h2 * h3 + h3 * action_size)
    bytes_accessed = (
        x.size * x.dtype.itemsize
        + sum(int(v.size) * v.dtype.itemsize for v in pp.values())
        + b_pad * action_size * 4)
    cost = pl.CostEstimate(flops=flops, transcendentals=0,
                           bytes_accessed=bytes_accessed)

    const = lambda i: (0, 0)   # weights/biases: same block every step -> no re-DMA
    in_specs = [
        pl.BlockSpec((tb, state_size), lambda i: (i, 0)),
        pl.BlockSpec(pp["w1"].shape, const), pl.BlockSpec(pp["b1"].shape, const),
        pl.BlockSpec(pp["w2"].shape, const), pl.BlockSpec(pp["b2"].shape, const),
        pl.BlockSpec(pp["w3"].shape, const), pl.BlockSpec(pp["b3"].shape, const),
        pl.BlockSpec(pp["w4"].shape, const), pl.BlockSpec(pp["b4"].shape, const),
    ]
    # Narrow (un-padded) output: (tb, action_size) is a full-last-dim block.
    out_spec = pl.BlockSpec((tb, action_size), lambda i: (i, 0))

    out_padded = pl.pallas_call(
        qnetwork_kernel,
        out_shape=jax.ShapeDtypeStruct((b_pad, action_size), jnp.float32),
        grid=grid,
        in_specs=in_specs,
        out_specs=out_spec,
        compiler_params=pltpu.CompilerParams(
            # Batch tiles are independent; v7x can shard them across its 2 TCs.
            # TODO(synk): try pltpu.CORE_PARALLEL if a v7x trace shows one TC idle.
            dimension_semantics=("parallel",)),
        cost_estimate=cost,
    )(x, pp["w1"], pp["b1"], pp["w2"], pp["b2"],
      pp["w3"], pp["b3"], pp["w4"], pp["b4"])

    return out_padded[:B]


def init_params(key, state_size, action_size):
    """Deterministic init mimicking nn.Linear shapes (uniform +-1/sqrt(fan_in))."""
    h1, h2, h3 = 128, 64, 32
    sizes = [(state_size, h1), (h1, h2), (h2, h3), (h3, action_size)]
    params = {}
    for idx, (fan_in, fan_out) in enumerate(sizes, start=1):
        key, kw, kb = jax.random.split(key, 3)
        bound = 1.0 / jnp.sqrt(jnp.float32(fan_in))
        params[f"w{idx}"] = jax.random.uniform(
            kw, (fan_in, fan_out), jnp.float32, minval=-bound, maxval=bound)
        params[f"b{idx}"] = jax.random.uniform(
            kb, (1, fan_out), jnp.float32, minval=-bound, maxval=bound)
    return params


def reference_forward_f32(state, params):
    """Pure-f32 reference (PyTorch-module semantics)."""
    x = jnp.maximum(state @ params["w1"] + params["b1"], 0.0)
    x = jnp.maximum(x @ params["w2"] + params["b2"], 0.0)
    x = jnp.maximum(x @ params["w3"] + params["b3"], 0.0)
    return x @ params["w4"] + params["b4"]


def reference_forward_bf16(state, params):
    """Plain-JAX reference matching the kernel's bf16-weights / f32-accum path."""
    def layer(x, w, b, relu):
        y = jnp.dot(x.astype(jnp.bfloat16), w.astype(jnp.bfloat16),
                    preferred_element_type=jnp.float32) + b
        return jnp.maximum(y, 0.0) if relu else y
    x = layer(state, params["w1"], params["b1"], True)
    x = layer(x, params["w2"], params["b2"], True)
    x = layer(x, params["w3"], params["b3"], True)
    return layer(x, params["w4"], params["b4"], False)


if __name__ == "__main__":
    state_size, action_size = 16, 4

    key = jax.random.PRNGKey(0)
    key, k_state = jax.random.split(key)
    params = init_params(key, state_size, action_size)
    pp = prepare_params(params)          # one-time: bf16 cast, reused per call

    # Small batch (typical single RL inference step); grid has one 16-row tile.
    state = jax.random.normal(k_state, (2, state_size), jnp.float32)
    out = jax.block_until_ready(qnetwork_forward(state, pp))
    assert out.shape == (2, action_size)
    assert jnp.allclose(out, reference_forward_bf16(state, params),
                        atol=1e-2, rtol=1e-2), "mismatch vs bf16 reference (B=2)"
    assert jnp.allclose(out, reference_forward_f32(state, params),
                        atol=5e-2), "mismatch vs f32 reference (B=2)"

    # Larger batch exercising the tiled, pipelined grid path (>= 2 grid steps:
    # tb = round_up(500, 16) = 512, batch padded 1000 -> 1024 and sliced back).
    key, k_big = jax.random.split(key)
    state_big = jax.random.normal(k_big, (1000, state_size), jnp.float32)
    out_big = jax.block_until_ready(qnetwork_forward(state_big, pp))
    assert out_big.shape == (1000, action_size)
    assert jnp.allclose(out_big, reference_forward_bf16(state_big, params),
                        atol=1e-2, rtol=1e-2), "mismatch vs bf16 reference (B=1000)"
    assert jnp.allclose(out_big, reference_forward_f32(state_big, params),
                        atol=5e-2), "mismatch vs f32 reference (B=1000)"

    print("KERNEL_OK")
</pallas_src>

<mosaic_0001>
module attributes {stable_mosaic.version = 11 : i64} {
  func.func @qnetwork_kernel(%arg0: i32, %arg1: memref<16x16xf32, #tpu.memory_space<vmem>>, %arg2: memref<16x128xbf16, #tpu.memory_space<vmem>>, %arg3: memref<1x128xf32, #tpu.memory_space<vmem>>, %arg4: memref<128x64xbf16, #tpu.memory_space<vmem>>, %arg5: memref<1x64xf32, #tpu.memory_space<vmem>>, %arg6: memref<64x32xbf16, #tpu.memory_space<vmem>>, %arg7: memref<1x32xf32, #tpu.memory_space<vmem>>, %arg8: memref<32x4xbf16, #tpu.memory_space<vmem>>, %arg9: memref<1x4xf32, #tpu.memory_space<vmem>>, %arg10: memref<16x4xf32, #tpu.memory_space<vmem>>) attributes {dimension_semantics = [#tpu.dimension_semantics<parallel>], iteration_bounds = array<i64: 1>, scalar_prefetch = 0 : i64, scratch_operands = 0 : i64, tpu.core_type = #tpu.core_type<tc>, window_params = [{transform_indices = @transform_0, window_bounds = array<i64: 16, 16>}, {pipeline_mode = #tpu.pipeline_mode<synchronous>, transform_indices = @transform_1, window_bounds = array<i64: 16, 128>}, {pipeline_mode = #tpu.pipeline_mode<synchronous>, transform_indices = @transform_2, window_bounds = array<i64: 1, 128>}, {pipeline_mode = #tpu.pipeline_mode<synchronous>, transform_indices = @transform_3, window_bounds = array<i64: 128, 64>}, {pipeline_mode = #tpu.pipeline_mode<synchronous>, transform_indices = @transform_4, window_bounds = array<i64: 1, 64>}, {pipeline_mode = #tpu.pipeline_mode<synchronous>, transform_indices = @transform_5, window_bounds = array<i64: 64, 32>}, {pipeline_mode = #tpu.pipeline_mode<synchronous>, transform_indices = @transform_6, window_bounds = array<i64: 1, 32>}, {pipeline_mode = #tpu.pipeline_mode<synchronous>, transform_indices = @transform_7, window_bounds = array<i64: 32, 4>}, {pipeline_mode = #tpu.pipeline_mode<synchronous>, transform_indices = @transform_8, window_bounds = array<i64: 1, 4>}, {transform_indices = @transform_9, window_bounds = array<i64: 16, 4>}]} {
    %c0 = arith.constant 0 : index
    %c0_0 = arith.constant 0 : index
    %0 = vector.load %arg1[%c0, %c0_0] : memref<16x16xf32, #tpu.memory_space<vmem>>, vector<16x16xf32>
    %1 = arith.truncf %0 : vector<16x16xf32> to vector<16x16xbf16>
    %c0_1 = arith.constant 0 : index
    %c0_2 = arith.constant 0 : index
    %2 = vector.load %arg2[%c0_1, %c0_2] : memref<16x128xbf16, #tpu.memory_space<vmem>>, vector<16x128xbf16>
    %cst = arith.constant dense<0.000000e+00> : vector<16x128xf32>
    %3 = tpu.matmul %1, %2, %cst {dimension_numbers = #tpu.dot_dimension_numbers<[1], [0], [0], [1], [0, 0, 1, 1], [], []>} : vector<16x16xbf16>, vector<16x128xbf16>, vector<16x128xf32> -> vector<16x128xf32>
    %c0_3 = arith.constant 0 : index
    %c0_4 = arith.constant 0 : index
    %4 = vector.load %arg3[%c0_3, %c0_4] : memref<1x128xf32, #tpu.memory_space<vmem>>, vector<1x128xf32>
    %5 = vector.broadcast %4 : vector<1x128xf32> to vector<16x128xf32>
    %6 = arith.addf %3, %5 : vector<16x128xf32>
    %cst_5 = arith.constant 0.000000e+00 : f32
    %7 = vector.broadcast %cst_5 : f32 to vector<16x128xf32>
    %8 = arith.maximumf %6, %7 : vector<16x128xf32>
    %9 = arith.truncf %8 : vector<16x128xf32> to vector<16x128xbf16>
    %c0_6 = arith.constant 0 : index
    %c0_7 = arith.constant 0 : index
    %10 = vector.load %arg4[%c0_6, %c0_7] : memref<128x64xbf16, #tpu.memory_space<vmem>>, vector<128x64xbf16>
    %cst_8 = arith.constant dense<0.000000e+00> : vector<16x64xf32>
    %11 = tpu.matmul %9, %10, %cst_8 {dimension_numbers = #tpu.dot_dimension_numbers<[1], [0], [0], [1], [0, 0, 1, 1], [], []>} : vector<16x128xbf16>, vector<128x64xbf16>, vector<16x64xf32> -> vector<16x64xf32>
    %c0_9 = arith.constant 0 : index
    %c0_10 = arith.constant 0 : index
    %12 = vector.load %arg5[%c0_9, %c0_10] : memref<1x64xf32, #tpu.memory_space<vmem>>, vector<1x64xf32>
    %13 = vector.broadcast %12 : vector<1x64xf32> to vector<16x64xf32>
    %14 = arith.addf %11, %13 : vector<16x64xf32>
    %cst_11 = arith.constant 0.000000e+00 : f32
    %15 = vector.broadcast %cst_11 : f32 to vector<16x64xf32>
    %16 = arith.maximumf %14, %15 : vector<16x64xf32>
    %17 = arith.truncf %16 : vector<16x64xf32> to vector<16x64xbf16>
    %c0_12 = arith.constant 0 : index
    %c0_13 = arith.constant 0 : index
    %18 = vector.load %arg6[%c0_12, %c0_13] : memref<64x32xbf16, #tpu.memory_space<vmem>>, vector<64x32xbf16>
    %cst_14 = arith.constant dense<0.000000e+00> : vector<16x32xf32>
    %19 = tpu.matmul %17, %18, %cst_14 {dimension_numbers = #tpu.dot_dimension_numbers<[1], [0], [0], [1], [0, 0, 1, 1], [], []>} : vector<16x64xbf16>, vector<64x32xbf16>, vector<16x32xf32> -> vector<16x32xf32>
    %c0_15 = arith.constant 0 : index
    %c0_16 = arith.constant 0 : index
    %20 = vector.load %arg7[%c0_15, %c0_16] : memref<1x32xf32, #tpu.memory_space<vmem>>, vector<1x32xf32>
    %21 = vector.broadcast %20 : vector<1x32xf32> to vector<16x32xf32>
    %22 = arith.addf %19, %21 : vector<16x32xf32>
    %cst_17 = arith.constant 0.000000e+00 : f32
    %23 = vector.broadcast %cst_17 : f32 to vector<16x32xf32>
    %24 = arith.maximumf %22, %23 : vector<16x32xf32>
    %25 = arith.truncf %24 : vector<16x32xf32> to vector<16x32xbf16>
    %c0_18 = arith.constant 0 : index
    %c0_19 = arith.constant 0 : index
    %26 = vector.load %arg8[%c0_18, %c0_19] : memref<32x4xbf16, #tpu.memory_space<vmem>>, vector<32x4xbf16>
    %cst_20 = arith.constant dense<0.000000e+00> : vector<16x4xf32>
    %27 = tpu.matmul %25, %26, %cst_20 {dimension_numbers = #tpu.dot_dimension_numbers<[1], [0], [0], [1], [0, 0, 1, 1], [], []>} : vector<16x32xbf16>, vector<32x4xbf16>, vector<16x4xf32> -> vector<16x4xf32>
    %c0_21 = arith.constant 0 : index
    %c0_22 = arith.constant 0 : index
    %28 = vector.load %arg9[%c0_21, %c0_22] : memref<1x4xf32, #tpu.memory_space<vmem>>, vector<1x4xf32>
    %29 = vector.broadcast %28 : vector<1x4xf32> to vector<16x4xf32>
    %30 = arith.addf %27, %29 : vector<16x4xf32>
    %c0_23 = arith.constant 0 : index
    %c0_24 = arith.constant 0 : index
    %31 = vector.load %arg10[%c0_23, %c0_24] : memref<16x4xf32, #tpu.memory_space<vmem>>, vector<16x4xf32>
    tpu.vector_store %arg10[%c0_23, %c0_24], %30 {strides = array<i32>} : memref<16x4xf32, #tpu.memory_space<vmem>>, vector<16x4xf32>,
    return
  }
  func.func @transform_0(%arg0: i32) -> (i32, i32) {
    %c0_i32 = arith.constant 0 : i32
    %c0_i32_0 = arith.constant 0 : i32
    return %arg0, %c0_i32 : i32, i32
  }
  func.func @transform_1(%arg0: i32) -> (i32, i32) {
    %c0_i32 = arith.constant 0 : i32
    %c0_i32_0 = arith.constant 0 : i32
    %c0_i32_1 = arith.constant 0 : i32
    return %c0_i32, %c0_i32_0 : i32, i32
  }
  func.func @transform_2(%arg0: i32) -> (i32, i32) {
    %c0_i32 = arith.constant 0 : i32
    %c0_i32_0 = arith.constant 0 : i32
    %c0_i32_1 = arith.constant 0 : i32
    return %c0_i32, %c0_i32_0 : i32, i32
  }
  func.func @transform_3(%arg0: i32) -> (i32, i32) {
    %c0_i32 = arith.constant 0 : i32
    %c0_i32_0 = arith.constant 0 : i32
    %c0_i32_1 = arith.constant 0 : i32
    return %c0_i32, %c0_i32_0 : i32, i32
  }
  func.func @transform_4(%arg0: i32) -> (i32, i32) {
    %c0_i32 = arith.constant 0 : i32
    %c0_i32_0 = arith.constant 0 : i32
    %c0_i32_1 = arith.constant 0 : i32
    return %c0_i32, %c0_i32_0 : i32, i32
  }
  func.func @transform_5(%arg0: i32) -> (i32, i32) {
    %c0_i32 = arith.constant 0 : i32
    %c0_i32_0 = arith.constant 0 : i32
    %c0_i32_1 = arith.constant 0 : i32
    return %c0_i32, %c0_i32_0 : i32, i32
  }
  func.func @transform_6(%arg0: i32) -> (i32, i32) {
    %c0_i32 = arith.constant 0 : i32
    %c0_i32_0 = arith.constant 0 : i32
    %c0_i32_1 = arith.constant 0 : i32
    return %c0_i32, %c0_i32_0 : i32, i32
  }
  func.func @transform_7(%arg0: i32) -> (i32, i32) {
    %c0_i32 = arith.constant 0 : i32
    %c0_i32_0 = arith.constant 0 : i32
    %c0_i32_1 = arith.constant 0 : i32
    return %c0_i32, %c0_i32_0 : i32, i32
  }
  func.func @transform_8(%arg0: i32) -> (i32, i32) {
    %c0_i32 = arith.constant 0 : i32
    %c0_i32_0 = arith.constant 0 : i32
    %c0_i32_1 = arith.constant 0 : i32
    return %c0_i32, %c0_i32_0 : i32, i32
  }
  func.func @transform_9(%arg0: i32) -> (i32, i32) {
    %c0_i32 = arith.constant 0 : i32
    %c0_i32_0 = arith.constant 0 : i32
    return %arg0, %c0_i32 : i32, i32
  }
}

</mosaic_0001>

<llo_original>
// kernel: qnetwork_forward.1
$region0: #{qnetwork_forward.1}
  #allocation0 [shape = 'u32[]', space=smem, size = 0x4, offset = 0x4, fixed_abs, tag = 'smem constant byte address 0x4 - core index']
  #allocation1 [shape = 'u32[144,128]{1,0:T(1,128)}', space=vmem, size = 0x12000, scoped, tag = 'internal scratch']
  %s0 = inlined_call_operand.vmem [shape: f32[16,16], index: 0, kind: input, shape index: {}]
  %s1 = inlined_call_operand.vmem [shape: bf16[16,128], index: 1, kind: input, shape index: {}]
  %s2 = inlined_call_operand.vmem [shape: f32[1,128], index: 2, kind: input, shape index: {}]
  %s3 = inlined_call_operand.vmem [shape: bf16[128,64], index: 3, kind: input, shape index: {}]
  %s4 = inlined_call_operand.vmem [shape: f32[1,64], index: 4, kind: input, shape index: {}]
  %s5 = inlined_call_operand.vmem [shape: bf16[64,32], index: 5, kind: input, shape index: {}]
  %s6 = inlined_call_operand.vmem [shape: f32[1,32], index: 6, kind: input, shape index: {}]
  %s7 = inlined_call_operand.vmem [shape: bf16[32,4], index: 7, kind: input, shape index: {}]
  %s8 = inlined_call_operand.vmem [shape: f32[1,4], index: 8, kind: input, shape index: {}]
  %s9 = inlined_call_operand.vmem [shape: f32[16,4], index: 9, kind: output, shape index: {}]
  %s10 = sld [smem:[#allocation0]]
  $region46: #{qnetwork_forward.1} parent=0
    _
  %s12 = ssub.s32 1, %s10
  %s13 = scalar_select 0, %s12, %s10
  // Predicated region
  $region2: #{qnetwork_forward.1} parent=0 // pred_check
    _
  $region3: #{qnetwork_forward.1} parent=0 // pred_check_branch
    %15 = sbr.rel (0) target = $region5
  $region4: #{qnetwork_forward.1} parent=0 // pred_region
    _
  $region5: #{qnetwork_forward.1} parent=0 // pred_fallthru
    _
  // Predicated region
  $region6: #{qnetwork_forward.1} parent=0 // pred_check
    _
  $region7: #{qnetwork_forward.1} parent=0 // pred_check_branch
    %17 = sbr.rel (0) target = $region9
  $region8: #{qnetwork_forward.1} parent=0 // pred_region
    _
  $region9: #{qnetwork_forward.1} parent=0 // pred_fallthru
    _
  // Predicated region
  $region10: #{qnetwork_forward.1} parent=0 // pred_check
    _
  $region11: #{qnetwork_forward.1} parent=0 // pred_check_branch
    %19 = sbr.rel (0) target = $region13
  $region12: #{qnetwork_forward.1} parent=0 // pred_region
    _
  $region13: #{qnetwork_forward.1} parent=0 // pred_fallthru
    _
  // Predicated region
  $region14: #{qnetwork_forward.1} parent=0 // pred_check
    _
  $region15: #{qnetwork_forward.1} parent=0 // pred_check_branch
    %21 = sbr.rel (0) target = $region17
  $region16: #{qnetwork_forward.1} parent=0 // pred_region
    _
  $region17: #{qnetwork_forward.1} parent=0 // pred_fallthru
    _
  // Predicated region
  $region18: #{qnetwork_forward.1} parent=0 // pred_check
    _
  $region19: #{qnetwork_forward.1} parent=0 // pred_check_branch
    %23 = sbr.rel (0) target = $region21
  $region20: #{qnetwork_forward.1} parent=0 // pred_region
    _
  $region21: #{qnetwork_forward.1} parent=0 // pred_fallthru
    _
  // Predicated region
  $region22: #{qnetwork_forward.1} parent=0 // pred_check
    _
  $region23: #{qnetwork_forward.1} parent=0 // pred_check_branch
    %25 = sbr.rel (0) target = $region25
  $region24: #{qnetwork_forward.1} parent=0 // pred_region
    _
  $region25: #{qnetwork_forward.1} parent=0 // pred_fallthru
    _
  // Predicated region
  $region26: #{qnetwork_forward.1} parent=0 // pred_check
    _
  $region27: #{qnetwork_forward.1} parent=0 // pred_check_branch
    %27 = sbr.rel (0) target = $region29
  $region28: #{qnetwork_forward.1} parent=0 // pred_region
    _
  $region29: #{qnetwork_forward.1} parent=0 // pred_fallthru
    _
  // Predicated region
  $region30: #{qnetwork_forward.1} parent=0 // pred_check
    _
  $region31: #{qnetwork_forward.1} parent=0 // pred_check_branch
    %29 = sbr.rel (0) target = $region33
  $region32: #{qnetwork_forward.1} parent=0 // pred_region
    _
  $region33: #{qnetwork_forward.1} parent=0 // pred_fallthru
    _
  // Predicated region
  $region34: #{qnetwork_forward.1} parent=0 // pred_check
    _
  $region35: #{qnetwork_forward.1} parent=0 // pred_check_branch
    %31 = sbr.rel (0) target = $region37
  $region36: #{qnetwork_forward.1} parent=0 // pred_region
    _
  $region37: #{qnetwork_forward.1} parent=0 // pred_fallthru
    _
  %v33 = vld [vmem:[%s0] sm:$0xff]
  %v34 = vld [vmem:[%s0 + $0x8] sm:$0xff]
  %v35 = vpack.c.bf16 %v34, %v33
  %v36 = vld [vmem:[%s1] sm:$0xf]
  %v37 = vld [vmem:[%s1 + $0x4] sm:$0xf]
  %v38 = vld [vmem:[%s2] sm:$0x1]
  %v40 = vlaneseq
  %v41 = vshrl.u32 %v40, 7
  %v42 = vsub.s32 0, %v41
  %v43 = vrot.slane %v38, %v42
  %v47 = vunpack.c.l.b16 %v36
  %v48 = vunpack.c.l.b16 %v37
  %v49 = vpack.c.b16 %v48, %v47
  %vm51 = vcmask 130048
  %v53 = vsel %vm51, %v35, 0
  %55 = vmatprep.subr.bf16.mxu0 0
  %56 = vmatpush1.bf16.msra.mxu0 %v49
  %57 = vmatprep.subr.bf16.mxu0 0
  %58 = vmatpush1.bf16.msra.mxu0 0
  %59 = vmatprep.subr.bf16.mxu0 0
  %60 = vmatpush1.bf16.msra.mxu0 0
  %61 = vmatprep.subr.bf16.mxu0 0
  %62 = vmatpush1.bf16.msra.mxu0 0
  %63 = vmatprep.subr.bf16.mxu0 0
  %64 = vmatpush1.bf16.msra.mxu0 0
  %65 = vmatprep.subr.bf16.mxu0 0
  %66 = vmatpush1.bf16.msra.mxu0 0
  %67 = vmatprep.subr.bf16.mxu0 0
  %68 = vmatpush1.bf16.msra.mxu0 0
  %69 = vmatprep.subr.bf16.mxu0 0
  %70 = vmatpush1.bf16.msra.mxu0 0
  %71 = vmatprep.subr.bf16.mxu0 0
  %72 = vmatpush1.bf16.msra.mxu0 0
  %73 = vmatprep.subr.bf16.mxu0 0
  %74 = vmatpush1.bf16.msra.mxu0 0
  %75 = vmatprep.subr.bf16.mxu0 0
  %76 = vmatpush1.bf16.msra.mxu0 0
  %77 = vmatprep.subr.bf16.mxu0 0
  %78 = vmatpush1.bf16.msra.mxu0 0
  %79 = vmatprep.subr.bf16.mxu0 0
  %80 = vmatpush1.bf16.msra.mxu0 0
  %81 = vmatprep.subr.bf16.mxu0 0
  %82 = vmatpush1.bf16.msra.mxu0 0
  %83 = vmatprep.subr.bf16.mxu0 0
  %84 = vmatpush1.bf16.msra.mxu0 0
  %85 = vmatprep.subr.bf16.mxu0 0
  %86 = vmatpush1.bf16.msra.mxu0 0
  %87 = vmatprep.mubr.bf16.mxu0 0
  %88 = vmatmul.mubr.bf16.gmra.mrb[0].mxu0 %v53
  %v89 = vpop.f32.mrb[0].mxu0
  %v90 = vadd.f32 %v43, %v89
  %v91 = vpop.f32.mrb[0].mxu0
  %v92 = vpop.f32.mrb[0].mxu0
  %v93 = vadd.f32 %v43, %v92
  %v94 = vpop.f32.mrb[0].mxu0
  %95 = vdwg.mxu0
  %v96 = vmax.f32 %v90, 0.0
  %v97 = vmax.f32 %v93, 0.0
  %v98 = vpack.c.bf16 %v97, %v96
  %v99 = vld [vmem:[%s3] sm:$0xf]
  %v100 = vld [vmem:[%s3 + $0x4] sm:$0xf]
  %v101 = vld [vmem:[%s3 + $0x8] sm:$0xf]
  %v102 = vld [vmem:[%s3 + $0xc] sm:$0xf]
  %v103 = vld [vmem:[%s3 + $0x10] sm:$0xf]
  %v104 = vld [vmem:[%s3 + $0x14] sm:$0xf]
  %v105 = vld [vmem:[%s3 + $0x18] sm:$0xf]
  %v106 = vld [vmem:[%s3 + $0x1c] sm:$0xf]
  %v107 = vld [vmem:[%s3 + $0x20] sm:$0xf]
  %v108 = vld [vmem:[%s3 + $0x24] sm:$0xf]
  %v109 = vld [vmem:[%s3 + $0x28] sm:$0xf]
  %v110 = vld [vmem:[%s3 + $0x2c] sm:$0xf]
  %v111 = vld [vmem:[%s3 + $0x30] sm:$0xf]
  %v112 = vld [vmem:[%s3 + $0x34] sm:$0xf]
  %v113 = vld [vmem:[%s3 + $0x38] sm:$0xf]
  %v114 = vld [vmem:[%s3 + $0x3c] sm:$0xf]
  %v115 = vld [vmem:[%s4] sm:$0x1]
  %v117 = vlaneseq
  %v118 = vshrl.u32 %v117, 7
  %v119 = vsub.s32 0, %v118
  %v120 = vrot.slane %v115, %v119
  %v138 = vunpack.c.l.b16 %v99
  %v139 = vunpack.c.l.b16 %v100
  %v140 = vunpack.c.l.b16 %v101
  %v141 = vunpack.c.l.b16 %v102
  %v142 = vunpack.c.l.b16 %v103
  %v143 = vunpack.c.l.b16 %v104
  %v144 = vunpack.c.l.b16 %v105
  %v145 = vunpack.c.l.b16 %v106
  %v146 = vunpack.c.l.b16 %v107
  %v147 = vunpack.c.l.b16 %v108
  %v148 = vunpack.c.l.b16 %v109
  %v149 = vunpack.c.l.b16 %v110
  %v150 = vunpack.c.l.b16 %v111
  %v151 = vunpack.c.l.b16 %v112
  %v152 = vunpack.c.l.b16 %v113
  %v153 = vunpack.c.l.b16 %v114
  %v154 = vpack.c.b16 %v139, %v138
  %v155 = vpack.c.b16 %v141, %v140
  %v156 = vpack.c.b16 %v143, %v142
  %v157 = vpack.c.b16 %v145, %v144
  %v158 = vpack.c.b16 %v147, %v146
  %v159 = vpack.c.b16 %v149, %v148
  %v160 = vpack.c.b16 %v151, %v150
  %v161 = vpack.c.b16 %v153, %v152
  %170 = vmatprep.subr.bf16.mxu0 0
  %171 = vmatpush1.bf16.msra.mxu0 %v154
  %172 = vmatprep.subr.bf16.mxu0 0
  %173 = vmatpush1.bf16.msra.mxu0 %v155
  %174 = vmatprep.subr.bf16.mxu0 0
  %175 = vmatpush1.bf16.msra.mxu0 %v156
  %176 = vmatprep.subr.bf16.mxu0 0
  %177 = vmatpush1.bf16.msra.mxu0 %v157
  %178 = vmatprep.subr.bf16.mxu0 0
  %179 = vmatpush1.bf16.msra.mxu0 %v158
  %180 = vmatprep.subr.bf16.mxu0 0
  %181 = vmatpush1.bf16.msra.mxu0 %v159
  %182 = vmatprep.subr.bf16.mxu0 0
  %183 = vmatpush1.bf16.msra.mxu0 %v160
  %184 = vmatprep.subr.bf16.mxu0 0
  %185 = vmatpush1.bf16.msra.mxu0 %v161
  %186 = vmatprep.subr.bf16.mxu0 0
  %187 = vmatpush1.bf16.msra.mxu0 0
  %188 = vmatprep.subr.bf16.mxu0 0
  %189 = vmatpush1.bf16.msra.mxu0 0
  %190 = vmatprep.subr.bf16.mxu0 0
  %191 = vmatpush1.bf16.msra.mxu0 0
  %192 = vmatprep.subr.bf16.mxu0 0
  %193 = vmatpush1.bf16.msra.mxu0 0
  %194 = vmatprep.subr.bf16.mxu0 0
  %195 = vmatpush1.bf16.msra.mxu0 0
  %196 = vmatprep.subr.bf16.mxu0 0
  %197 = vmatpush1.bf16.msra.mxu0 0
  %198 = vmatprep.subr.bf16.mxu0 0
  %199 = vmatpush1.bf16.msra.mxu0 0
  %200 = vmatprep.subr.bf16.mxu0 0
  %201 = vmatpush1.bf16.msra.mxu0 0
  %202 = vmatprep.mubr.bf16.mxu0 0
  %203 = vmatmul.mubr.bf16.gmra.mrb[0].mxu0 %v98
  %v204 = vpop.f32.mrb[0].mxu0
  %v205 = vadd.f32 %v120, %v204
  %v206 = vpop.f32.mrb[0].mxu0
  %v207 = vpop.f32.mrb[0].mxu0
  %v208 = vadd.f32 %v120, %v207
  %v209 = vpop.f32.mrb[0].mxu0
  %210 = vdwg.mxu0
  %v211 = vmax.f32 %v205, 0.0
  %v212 = vmax.f32 %v208, 0.0
  %v213 = vpack.c.bf16 %v212, %v211
  %v214 = vld [vmem:[%s5] sm:$0xf]
  %v215 = vld [vmem:[%s5 + $0x4] sm:$0xf]
  %v216 = vld [vmem:[%s5 + $0x8] sm:$0xf]
  %v217 = vld [vmem:[%s5 + $0xc] sm:$0xf]
  %v218 = vld [vmem:[%s5 + $0x10] sm:$0xf]
  %v219 = vld [vmem:[%s5 + $0x14] sm:$0xf]
  %v220 = vld [vmem:[%s5 + $0x18] sm:$0xf]
  %v221 = vld [vmem:[%s5 + $0x1c] sm:$0xf]
  %v222 = vld [vmem:[%s6] sm:$0x1]
  %v224 = vlaneseq
  %v225 = vshrl.u32 %v224, 7
  %v226 = vsub.s32 0, %v225
  %v227 = vrot.slane %v222, %v226
  %v237 = vunpack.c.l.b16 %v214
  %v238 = vunpack.c.l.b16 %v215
  %v239 = vunpack.c.l.b16 %v216
  %v240 = vunpack.c.l.b16 %v217
  %v241 = vunpack.c.l.b16 %v218
  %v242 = vunpack.c.l.b16 %v219
  %v243 = vunpack.c.l.b16 %v220
  %v244 = vunpack.c.l.b16 %v221
  %v245 = vpack.c.b16 %v238, %v237
  %v246 = vpack.c.b16 %v240, %v239
  %v247 = vpack.c.b16 %v242, %v241
  %v248 = vpack.c.b16 %v244, %v243
  %vm253 = vcmask 523264
  %v255 = vsel %vm253, %v213, 0
  %257 = vmatprep.subr.bf16.mxu0 0
  %258 = vmatpush1.bf16.msra.mxu0 %v245
  %259 = vmatprep.subr.bf16.mxu0 0
  %260 = vmatpush1.bf16.msra.mxu0 %v246
  %261 = vmatprep.subr.bf16.mxu0 0
  %262 = vmatpush1.bf16.msra.mxu0 %v247
  %263 = vmatprep.subr.bf16.mxu0 0
  %264 = vmatpush1.bf16.msra.mxu0 %v248
  %265 = vmatprep.subr.bf16.mxu0 0
  %266 = vmatpush1.bf16.msra.mxu0 0
  %267 = vmatprep.subr.bf16.mxu0 0
  %268 = vmatpush1.bf16.msra.mxu0 0
  %269 = vmatprep.subr.bf16.mxu0 0
  %270 = vmatpush1.bf16.msra.mxu0 0
  %271 = vmatprep.subr.bf16.mxu0 0
  %272 = vmatpush1.bf16.msra.mxu0 0
  %273 = vmatprep.subr.bf16.mxu0 0
  %274 = vmatpush1.bf16.msra.mxu0 0
  %275 = vmatprep.subr.bf16.mxu0 0
  %276 = vmatpush1.bf16.msra.mxu0 0
  %277 = vmatprep.subr.bf16.mxu0 0
  %278 = vmatpush1.bf16.msra.mxu0 0
  %279 = vmatprep.subr.bf16.mxu0 0
  %280 = vmatpush1.bf16.msra.mxu0 0
  %281 = vmatprep.subr.bf16.mxu0 0
  %282 = vmatpush1.bf16.msra.mxu0 0
  %283 = vmatprep.subr.bf16.mxu0 0
  %284 = vmatpush1.bf16.msra.mxu0 0
  %285 = vmatprep.subr.bf16.mxu0 0
  %286 = vmatpush1.bf16.msra.mxu0 0
  %287 = vmatprep.subr.bf16.mxu0 0
  %288 = vmatpush1.bf16.msra.mxu0 0
  %289 = vmatprep.mubr.bf16.mxu0 0
  %290 = vmatmul.mubr.bf16.gmra.mrb[0].mxu0 %v255
  %v291 = vpop.f32.mrb[0].mxu0
  %v292 = vadd.f32 %v227, %v291
  %v293 = vpop.f32.mrb[0].mxu0
  %v294 = vpop.f32.mrb[0].mxu0
  %v295 = vadd.f32 %v227, %v294
  %v296 = vpop.f32.mrb[0].mxu0
  %297 = vdwg.mxu0
  %v298 = vmax.f32 %v292, 0.0
  %v299 = vmax.f32 %v295, 0.0
  %v300 = vpack.c.bf16 %v299, %v298
  %v301 = vld [vmem:[%s7] sm:$0xf]
  %v302 = vld [vmem:[%s7 + $0x4] sm:$0xf]
  %v303 = vld [vmem:[%s7 + $0x8] sm:$0xf]
  %v304 = vld [vmem:[%s7 + $0xc] sm:$0xf]
  %v305 = vld [vmem:[%s8] sm:$0x1]
  %v307 = vlaneseq
  %v308 = vshrl.u32 %v307, 7
  %v309 = vsub.s32 0, %v308
  %v310 = vrot.slane %v305, %v309
  %v316 = vunpack.c.l.b16 %v301
  %v317 = vunpack.c.l.b16 %v302
  %v318 = vunpack.c.l.b16 %v303
  %v319 = vunpack.c.l.b16 %v304
  %v320 = vpack.c.b16 %v317, %v316
  %v321 = vpack.c.b16 %v319, %v318
  %vm324 = vcmask 261120
  %v326 = vsel %vm324, %v300, 0
  %328 = vmatprep.subr.bf16.mxu0 0
  %329 = vmatpush1.bf16.msra.mxu0 %v320
  %330 = vmatprep.subr.bf16.mxu0 0
  %331 = vmatpush1.bf16.msra.mxu0 %v321
  %332 = vmatprep.subr.bf16.mxu0 0
  %333 = vmatpush1.bf16.msra.mxu0 0
  %334 = vmatprep.subr.bf16.mxu0 0
  %335 = vmatpush1.bf16.msra.mxu0 0
  %336 = vmatprep.subr.bf16.mxu0 0
  %337 = vmatpush1.bf16.msra.mxu0 0
  %338 = vmatprep.subr.bf16.mxu0 0
  %339 = vmatpush1.bf16.msra.mxu0 0
  %340 = vmatprep.subr.bf16.mxu0 0
  %341 = vmatpush1.bf16.msra.mxu0 0
  %342 = vmatprep.subr.bf16.mxu0 0
  %343 = vmatpush1.bf16.msra.mxu0 0
  %344 = vmatprep.subr.bf16.mxu0 0
  %345 = vmatpush1.bf16.msra.mxu0 0
  %346 = vmatprep.subr.bf16.mxu0 0
  %347 = vmatpush1.bf16.msra.mxu0 0
  %348 = vmatprep.subr.bf16.mxu0 0
  %349 = vmatpush1.bf16.msra.mxu0 0
  %350 = vmatprep.subr.bf16.mxu0 0
  %351 = vmatpush1.bf16.msra.mxu0 0
  %352 = vmatprep.subr.bf16.mxu0 0
  %353 = vmatpush1.bf16.msra.mxu0 0
  %354 = vmatprep.subr.bf16.mxu0 0
  %355 = vmatpush1.bf16.msra.mxu0 0
  %356 = vmatprep.subr.bf16.mxu0 0
  %357 = vmatpush1.bf16.msra.mxu0 0
  %358 = vmatprep.subr.bf16.mxu0 0
  %359 = vmatpush1.bf16.msra.mxu0 0
  %360 = vmatprep.mubr.bf16.mxu0 0
  %361 = vmatmul.mubr.bf16.gmra.mrb[0].mxu0 %v326
  %v362 = vpop.f32.mrb[0].mxu0
  %v363 = vadd.f32 %v310, %v362
  %v364 = vpop.f32.mrb[0].mxu0
  %v365 = vpop.f32.mrb[0].mxu0
  %v366 = vadd.f32 %v310, %v365
  %v367 = vpop.f32.mrb[0].mxu0
  %368 = vdwg.mxu0
  %vm369 = vcmask 31744
  %370 = vst.msk [vmem:[%s9] sm:$0xff] %vm369, %v363
  %371 = vst.msk [vmem:[%s9 + $0x8] sm:$0xff] %vm369, %v366
  // Predicated region
  $region38: #{qnetwork_forward.1} parent=0 // pred_check
    _
  $region39: #{qnetwork_forward.1} parent=0 // pred_check_branch
    %373 = sbr.rel (0) target = $region41
  $region40: #{qnetwork_forward.1} parent=0 // pred_region
    _
  $region41: #{qnetwork_forward.1} parent=0 // pred_fallthru
    _
  // Predicated region
  $region42: #{qnetwork_forward.1} parent=0 // pred_check
    _
  $region43: #{qnetwork_forward.1} parent=0 // pred_check_branch
    %375 = sbr.rel (0) target = $region45
  $region44: #{qnetwork_forward.1} parent=0 // pred_region
    _
  $region45: #{qnetwork_forward.1} parent=0 // pred_fallthru
    _

</llo_original>
